<compile_context>
chip_gen: v7x
topology: tpu7x:2x2x1
jax: 0.10.0
libtpu: 0.0.40
codegen_flags: <defaults>
</compile_context>

<pallas_src>
import functools

import jax
import jax.numpy as jnp
from jax.experimental import pallas as pl
from jax.experimental.pallas import tpu as pltpu

PATCH = 16       # ViT patch size implied by `new_w // 16 * 16`
EMBED_DIM = 32   # small synthetic embedding dim (ViT-S would be 384)
UP = 2           # self.up in the PyTorch module
LANE = 128


def _round_up(x, m):
    return (x + m - 1) // m * m


# --------------------------------------------------------------------------
# Kernel 1: patch embedding  F = X @ W   (row-tiled, parallel)
# --------------------------------------------------------------------------
def embed_kernel(x_ref, w_ref, f_ref):
    # Synthetic ViT stand-in: bf16 operands, f32 accumulation on the MXU.
    x = x_ref[...].astype(jnp.bfloat16)
    w = w_ref[...].astype(jnp.bfloat16)
    f_ref[...] = jnp.dot(x, w, preferred_element_type=jnp.float32)


# --------------------------------------------------------------------------
# Kernel 2: streamed inverse-degree scoring.
# Each grid step computes one (TILE_N, N_pad) stripe of A = F F^T, thresholds
# it, reduces it to per-row degrees and discards it.
# --------------------------------------------------------------------------
def degree_kernel(f_tile_ref, f_full_ref, d_ref, *, n_valid, tile_n):
    i = pl.program_id(0)
    f_tile = f_tile_ref[...]                       # (TILE_N, D_pad)  f32
    f_full = f_full_ref[...]                       # (N_pad,  D_pad)  f32

    # A stripe = f_tile @ f_full^T, no explicit transpose (contract dim 1 / 1).
    a = jax.lax.dot_general(
        f_tile, f_full,
        dimension_numbers=(((1,), (1,)), ((), ())),
        preferred_element_type=jnp.float32)        # (TILE_N, N_pad)

    pos = jnp.where(a > 0.0, 1.0, 0.0)
    row_cnt = jnp.sum(pos, axis=1, keepdims=True)  # (TILE_N, 1)

    # Remove the diagonal contribution analytically: A[i,i] = ||f_i||^2.
    sq = jnp.sum(f_tile * f_tile, axis=1, keepdims=True)
    diag_pos = jnp.where(sq > 0.0, 1.0, 0.0)
    deg = row_cnt - diag_pos

    # Padded rows must never win the argmin / enter the k lowest degrees.
    row_ids = i * tile_n + jax.lax.broadcasted_iota(jnp.int32, deg.shape, 0)
    d_ref[...] = jnp.where(row_ids < n_valid, deg, jnp.float32(n_valid + 1))


# --------------------------------------------------------------------------
# Kernel 3: seed selection + seed expansion + mask (single small block).
# Only O(N^2) object is the pairwise degree-compare used for the stable rank.
# --------------------------------------------------------------------------
def finalize_kernel(d_col_ref, d_row_ref, f_ref, out_ref, *, k_patches):
    d_col = d_col_ref[...]                         # (N_pad, 1)
    d_row = d_row_ref[...]                         # (1, N_pad)
    f = f_ref[...]                                 # (N_pad, D_pad)
    n_pad = f.shape[0]

    # Stable ascending rank of each degree, fused into a single select.
    row_i = jax.lax.broadcasted_iota(jnp.int32, (n_pad, n_pad), 0)
    col_j = jax.lax.broadcasted_iota(jnp.int32, (n_pad, n_pad), 1)
    cond = (d_row < d_col) | ((d_row == d_col) & (col_j < row_i))
    rank = jnp.sum(jnp.where(cond, 1.0, 0.0), axis=1, keepdims=True)
    potentials = rank < jnp.float32(k_patches)     # (N_pad, 1)

    # Seed = patch with lowest degree (first occurrence on ties).
    idx = jax.lax.broadcasted_iota(jnp.int32, (n_pad, 1), 0)
    d_min = jnp.min(d_col)
    seed_idx = jnp.min(jnp.where(d_col == d_min, idx, n_pad))

    # f_seed via a one-hot MXU matvec (no NxN select, no dynamic slice).
    seed_onehot = jnp.where(
        jax.lax.broadcasted_iota(jnp.int32, (1, n_pad), 1) == seed_idx,
        jnp.float32(1.0), jnp.float32(0.0))                          # (1, N_pad)
    f_seed = jnp.dot(seed_onehot, f, preferred_element_type=jnp.float32)  # (1, D_pad)

    # a_seed = A[:, seed] = F @ f_seed   (A symmetric)
    a_seed = jax.lax.dot_general(
        f, f_seed, dimension_numbers=(((1,), (1,)), ((), ())),
        preferred_element_type=jnp.float32)                          # (N_pad, 1)

    # Seed expansion: low-degree patches positively correlated with the seed.
    similars = jnp.where(potentials & (a_seed > 0.0),
                         jnp.float32(1.0), jnp.float32(0.0))         # (N_pad, 1)

    # m_j = sum_{i in similars} A[i, j]  ==  ((s^T F) F^T)_j : two thin matmuls.
    sf = jax.lax.dot_general(
        similars, f, dimension_numbers=(((0,), (0,)), ((), ())),
        preferred_element_type=jnp.float32)                          # (1, D_pad)
    m = jax.lax.dot_general(
        sf, f, dimension_numbers=(((1,), (1,)), ((), ())),
        preferred_element_type=jnp.float32)                          # (1, N_pad)

    out_ref[...] = jnp.where(m > 0.0, jnp.float32(1.0), jnp.float32(0.0))


# --------------------------------------------------------------------------
# Wrapper (preprocessing glue + three pallas_calls)
# --------------------------------------------------------------------------
def extract_patches(img_hwc):
    h, w, c = img_hwc.shape
    hp, wp = h // PATCH, w // PATCH
    p = img_hwc.reshape(hp, PATCH, wp, PATCH, c)
    p = p.transpose(0, 2, 1, 3, 4).reshape(hp * wp, PATCH * PATCH * c)
    return p, hp, wp


def lost_forward(img_hwc, w_embed, k, alpha=1.0):
    # `alpha` is a constructor arg of Lost_module not exercised in the visible
    # forward path; kept for signature parity.
    del alpha

    # == T.Resize(((up*h)//16*16, (up*w)//16*16)) + ToTensor()
    h, w, c = img_hwc.shape
    new_h = (h * UP) // PATCH * PATCH
    new_w = (w * UP) // PATCH * PATCH
    img = jax.image.resize(img_hwc, (new_h, new_w, c), method="bilinear")

    patches, hp, wp = extract_patches(img)
    n, p_dim = patches.shape
    k_patches = k * UP ** 2            # self.lost = Lost_module(..., k=k*up**2)

    d_emb = w_embed.shape[1]
    n_pad = max(_round_up(n, LANE), LANE)
    d_pad = max(_round_up(d_emb, LANE), LANE)
    tile_n = LANE
    grid_rows = n_pad // tile_n

    x = jnp.zeros((n_pad, p_dim), jnp.float32).at[:n].set(
        patches.astype(jnp.float32))
    wmat = jnp.zeros((p_dim, d_pad), jnp.float32).at[:, :d_emb].set(
        w_embed.astype(jnp.float32))

    par = pltpu.CompilerParams(dimension_semantics=("parallel",))

    # --- kernel 1: features -------------------------------------------------
    feats = pl.pallas_call(
        embed_kernel,
        out_shape=jax.ShapeDtypeStruct((n_pad, d_pad), jnp.float32),
        grid_spec=pltpu.PrefetchScalarGridSpec(
            num_scalar_prefetch=0, grid=(grid_rows,),
            in_specs=[pl.BlockSpec((tile_n, p_dim), lambda i: (i, 0)),
                      pl.BlockSpec((p_dim, d_pad), lambda i: (0, 0))],
            out_specs=pl.BlockSpec((tile_n, d_pad), lambda i: (i, 0))),
        compiler_params=par,
    )(x, wmat)

    # --- kernel 2: streamed degrees ------------------------------------------
    degrees = pl.pallas_call(
        functools.partial(degree_kernel, n_valid=n, tile_n=tile_n),
        out_shape=jax.ShapeDtypeStruct((n_pad, 1), jnp.float32),
        grid_spec=pltpu.PrefetchScalarGridSpec(
            num_scalar_prefetch=0, grid=(grid_rows,),
            in_specs=[pl.BlockSpec((tile_n, d_pad), lambda i: (i, 0)),
                      pl.BlockSpec((n_pad, d_pad), lambda i: (0, 0))],
            out_specs=pl.BlockSpec((tile_n, 1), lambda i: (i, 0))),
        compiler_params=par,
    )(feats, feats)

    # Both orientations of d (the reshape is free outside the kernel; avoids an
    # in-kernel (N,1)->(1,N) transpose).
    deg_row = degrees.reshape(1, n_pad)

    # --- kernel 3: seed + expansion + mask ------------------------------------
    fin_bytes = (3 * n_pad * n_pad + 8 * n_pad * d_pad + 16 * n_pad) * 4
    fin_params = pltpu.CompilerParams(
        vmem_limit_bytes=int(min(max(fin_bytes, 16 * 1024 * 1024),
                                 64 * 1024 * 1024)))
    mask_flat = pl.pallas_call(
        functools.partial(finalize_kernel, k_patches=k_patches),
        out_shape=jax.ShapeDtypeStruct((1, n_pad), jnp.float32),
        in_specs=[pl.BlockSpec(memory_space=pltpu.MemorySpace.VMEM),
                  pl.BlockSpec(memory_space=pltpu.MemorySpace.VMEM),
                  pl.BlockSpec(memory_space=pltpu.MemorySpace.VMEM)],
        out_specs=pl.BlockSpec(memory_space=pltpu.MemorySpace.VMEM),
        compiler_params=fin_params,
    )(degrees, deg_row, feats)

    out = mask_flat[0, :n].reshape(hp, wp)
    # TODO(synk): `clean()` (cv2.resize + Otsu threshold +
    # connectedComponentsWithStats largest-component selection) has no Pallas
    # equivalent; the patch-level LOST mask is returned directly.
    return out


if __name__ == "__main__":
    key = jax.random.PRNGKey(0)
    k_img, k_w = jax.random.split(key)

    # 64x64 RGB image -> up-resized to 128x128 -> 8x8 = 64 patches of 768 vals.
    img = jax.random.uniform(k_img, (64, 64, 3), dtype=jnp.float32)
    w_embed = 0.02 * jax.random.normal(
        k_w, (PATCH * PATCH * 3, EMBED_DIM), dtype=jnp.float32)

    out = lost_forward(img, w_embed, k=4, alpha=1.0)
    out = jax.block_until_ready(out)
    assert out.shape == (8, 8) and out.dtype == jnp.float32
    print("KERNEL_OK")
</pallas_src>

<mosaic_0001>
module attributes {stable_mosaic.version = 11 : i64} {
  func.func @embed_kernel(%arg0: i32, %arg1: memref<128x768xf32, #tpu.memory_space<vmem>>, %arg2: memref<768x128xf32, #tpu.memory_space<vmem>>, %arg3: memref<128x128xf32, #tpu.memory_space<vmem>>) attributes {dimension_semantics = [#tpu.dimension_semantics<parallel>], iteration_bounds = array<i64: 1>, scalar_prefetch = 0 : i64, scratch_operands = 0 : i64, tpu.core_type = #tpu.core_type<tc>, window_params = [{transform_indices = @transform_0, window_bounds = array<i64: 128, 768>}, {pipeline_mode = #tpu.pipeline_mode<synchronous>, transform_indices = @transform_1, window_bounds = array<i64: 768, 128>}, {transform_indices = @transform_2, window_bounds = array<i64: 128, 128>}]} {
    %c0 = arith.constant 0 : index
    %c0_0 = arith.constant 0 : index
    %0 = vector.load %arg1[%c0, %c0_0] : memref<128x768xf32, #tpu.memory_space<vmem>>, vector<128x768xf32>
    %1 = arith.truncf %0 : vector<128x768xf32> to vector<128x768xbf16>
    %c0_1 = arith.constant 0 : index
    %c0_2 = arith.constant 0 : index
    %2 = vector.load %arg2[%c0_1, %c0_2] : memref<768x128xf32, #tpu.memory_space<vmem>>, vector<768x128xf32>
    %3 = arith.truncf %2 : vector<768x128xf32> to vector<768x128xbf16>
    %cst = arith.constant dense<0.000000e+00> : vector<128x128xf32>
    %4 = tpu.matmul %1, %3, %cst {dimension_numbers = #tpu.dot_dimension_numbers<[1], [0], [0], [1], [0, 0, 1, 1], [], []>} : vector<128x768xbf16>, vector<768x128xbf16>, vector<128x128xf32> -> vector<128x128xf32>
    %c0_3 = arith.constant 0 : index
    %c0_4 = arith.constant 0 : index
    %5 = vector.load %arg3[%c0_3, %c0_4] : memref<128x128xf32, #tpu.memory_space<vmem>>, vector<128x128xf32>
    tpu.vector_store %arg3[%c0_3, %c0_4], %4 {strides = array<i32>} : memref<128x128xf32, #tpu.memory_space<vmem>>, vector<128x128xf32>,
    return
  }
  func.func @transform_0(%arg0: i32) -> (i32, i32) {
    %c0_i32 = arith.constant 0 : i32
    %c0_i32_0 = arith.constant 0 : i32
    return %arg0, %c0_i32 : i32, i32
  }
  func.func @transform_1(%arg0: i32) -> (i32, i32) {
    %c0_i32 = arith.constant 0 : i32
    %c0_i32_0 = arith.constant 0 : i32
    %c0_i32_1 = arith.constant 0 : i32
    return %c0_i32, %c0_i32_0 : i32, i32
  }
  func.func @transform_2(%arg0: i32) -> (i32, i32) {
    %c0_i32 = arith.constant 0 : i32
    %c0_i32_0 = arith.constant 0 : i32
    return %arg0, %c0_i32 : i32, i32
  }
}

</mosaic_0001>

<llo_original>
// kernel: tpu_custom_call.1
$region0: #{tpu_custom_call.1}
  #allocation0 [shape = 'u32[]', space=smem, size = 0x4, offset = 0x4, fixed_abs, tag = 'smem constant byte address 0x4 - core index']
  #allocation1 [shape = 'u32[144,128]{1,0:T(1,128)}', space=vmem, size = 0x12000, scoped, tag = 'internal scratch']
  %s0 = inlined_call_operand.hbm [shape: f32[128,768], index: 0, kind: input, shape index: {}]
  %s1 = inlined_call_operand.hbm [shape: f32[768,128], index: 1, kind: input, shape index: {}]
  %s2 = inlined_call_operand.hbm [shape: f32[128,128], index: 2, kind: output, shape index: {}]
  %s3 = sld [smem:[#allocation0]]
  $region26: #{tpu_custom_call.1} parent=0
    _
  %s5 = ssub.s32 1, %s3
  %s6 = scalar_select 0, %s5, %s3
  $region1: #{tpu_custom_call.1} parent=0
    #allocation2 [shape = 'u8[393216]{0}', space=vmem, size = 0x60000, scoped, tag = 'input window, operand 0, single buffered']
    #allocation3 [shape = 's32[1]{0}', space=sflag, size = 0x4, scoped, tag = 'scoped memory for tpu_custom_call.1']
    #allocation4 [shape = 's32[1]{0}', space=sflag, size = 0x4, scoped, tag = 'scoped memory for tpu_custom_call.1']
    #allocation5 [shape = 'u8[393216]{0}', space=vmem, size = 0x60000, scoped, tag = 'input window, operand 1, single buffered']
    #allocation6 [shape = 's32[1]{0}', space=sflag, size = 0x4, scoped, tag = 'scoped memory for tpu_custom_call.1']
    #allocation7 [shape = 'u8[65536]{0}', space=vmem, size = 0x10000, scoped, tag = 'output window, operand 0, single buffered']
    %7 = vsyncpa [#allocation3], 0
    %8 = vsyncpa [#allocation6], 0
    %9 = vsyncpa [#allocation4], 0
    // Predicated region
    $region2: #{tpu_custom_call.1} parent=1 // pred_check
      _
    $region3: #{tpu_custom_call.1} parent=1 // pred_check_branch
      %11 = sbr.rel (0) target = $region5
    $region4: #{tpu_custom_call.1} parent=1 // pred_region
      %s13 = ssub.s32 12288, 12288
      %14 = vsyncadd [#allocation3], %s13
      %s15 = sshll.u32 [#allocation2], 4
      %s16 = int_to_ptr.vmem [resolvable:$true] %s15
      %21 = dma.hbm_to_vmem [thread:$0]  %s0, 12288, %s16, [#allocation3], 768, 768, 48
    $region5: #{tpu_custom_call.1} parent=1 // pred_fallthru
      _
    // Predicated region
    $region6: #{tpu_custom_call.1} parent=1 // pred_check
      _
    $region7: #{tpu_custom_call.1} parent=1 // pred_check_branch
      %23 = sbr.rel (0) target = $region9
    $region8: #{tpu_custom_call.1} parent=1 // pred_region
      %s25 = ssub.s32 12288, 12288
      %26 = vsyncadd [#allocation6], %s25
      %s27 = sshll.u32 [#allocation5], 4
      %s28 = int_to_ptr.vmem [resolvable:$true] %s27
      %33 = dma.hbm_to_vmem [thread:$0]  %s1, 12288, %s28, [#allocation6], 128, 128, 8
    $region9: #{tpu_custom_call.1} parent=1 // pred_fallthru
      _
    // Predicated region
    $region10: #{tpu_custom_call.1} parent=1 // pred_check
      _
    $region11: #{tpu_custom_call.1} parent=1 // pred_check_branch
      %35 = sbr.rel (0) target = $region13
    $region12: #{tpu_custom_call.1} parent=1 // pred_region
      %36 = dma.done [#allocation3], 12288
    $region13: #{tpu_custom_call.1} parent=1 // pred_fallthru
      _
    // Predicated region
    $region14: #{tpu_custom_call.1} parent=1 // pred_check
      _
    $region15: #{tpu_custom_call.1} parent=1 // pred_check_branch
      %38 = sbr.rel (0) target = $region17
    $region16: #{tpu_custom_call.1} parent=1 // pred_region
      %39 = dma.done [#allocation6], 12288
    $region17: #{tpu_custom_call.1} parent=1 // pred_fallthru
      _
    %v41 = vld [vmem:[#allocation2] sm:$0xff]
    %v42 = vld [vmem:[#allocation2 + $0x8] sm:$0xff]
    %v43 = vld [vmem:[#allocation2 + $0x10] sm:$0xff]
    %v44 = vld [vmem:[#allocation2 + $0x18] sm:$0xff]
    %v45 = vld [vmem:[#allocation2 + $0x20] sm:$0xff]
    %v46 = vld [vmem:[#allocation2 + $0x28] sm:$0xff]
    %v47 = vld [vmem:[#allocation2 + $0x30] sm:$0xff]
    %v48 = vld [vmem:[#allocation2 + $0x38] sm:$0xff]
    %v49 = vld [vmem:[#allocation2 + $0x40] sm:$0xff]
    %v50 = vld [vmem:[#allocation2 + $0x48] sm:$0xff]
    %v51 = vld [vmem:[#allocation2 + $0x50] sm:$0xff]
    %v52 = vld [vmem:[#allocation2 + $0x58] sm:$0xff]
    %v53 = vld [vmem:[#allocation2 + $0x60] sm:$0xff]
    %v54 = vld [vmem:[#allocation2 + $0x68] sm:$0xff]
    %v55 = vld [vmem:[#allocation2 + $0x70] sm:$0xff]
    %v56 = vld [vmem:[#allocation2 + $0x78] sm:$0xff]
    %v57 = vld [vmem:[#allocation2 + $0x80] sm:$0xff]
    %v58 = vld [vmem:[#allocation2 + $0x88] sm:$0xff]
    %v59 = vld [vmem:[#allocation2 + $0x90] sm:$0xff]
    %v60 = vld [vmem:[#allocation2 + $0x98] sm:$0xff]
    %v61 = vld [vmem:[#allocation2 + $0xa0] sm:$0xff]
    %v62 = vld [vmem:[#allocation2 + $0xa8] sm:$0xff]
    %v63 = vld [vmem:[#allocation2 + $0xb0] sm:$0xff]
    %v64 = vld [vmem:[#allocation2 + $0xb8] sm:$0xff]
    %v65 = vld [vmem:[#allocation2 + $0xc0] sm:$0xff]
    %v66 = vld [vmem:[#allocation2 + $0xc8] sm:$0xff]
    %v67 = vld [vmem:[#allocation2 + $0xd0] sm:$0xff]
    %v68 = vld [vmem:[#allocation2 + $0xd8] sm:$0xff]
    %v69 = vld [vmem:[#allocation2 + $0xe0] sm:$0xff]
    %v70 = vld [vmem:[#allocation2 + $0xe8] sm:$0xff]
    %v71 = vld [vmem:[#allocation2 + $0xf0] sm:$0xff]
    %v72 = vld [vmem:[#allocation2 + $0xf8] sm:$0xff]
    %v73 = vld [vmem:[#allocation2 + $0x100] sm:$0xff]
    %v74 = vld [vmem:[#allocation2 + $0x108] sm:$0xff]
    %v75 = vld [vmem:[#allocation2 + $0x110] sm:$0xff]
    %v76 = vld [vmem:[#allocation2 + $0x118] sm:$0xff]
    %v77 = vld [vmem:[#allocation2 + $0x120] sm:$0xff]
    %v78 = vld [vmem:[#allocation2 + $0x128] sm:$0xff]
    %v79 = vld [vmem:[#allocation2 + $0x130] sm:$0xff]
    %v80 = vld [vmem:[#allocation2 + $0x138] sm:$0xff]
    %v81 = vld [vmem:[#allocation2 + $0x140] sm:$0xff]
    %v82 = vld [vmem:[#allocation2 + $0x148] sm:$0xff]
    %v83 = vld [vmem:[#allocation2 + $0x150] sm:$0xff]
    %v84 = vld [vmem:[#allocation2 + $0x158] sm:$0xff]
    %v85 = vld [vmem:[#allocation2 + $0x160] sm:$0xff]
    %v86 = vld [vmem:[#allocation2 + $0x168] sm:$0xff]
    %v87 = vld [vmem:[#allocation2 + $0x170] sm:$0xff]
    %v88 = vld [vmem:[#allocation2 + $0x178] sm:$0xff]
    %v89 = vld [vmem:[#allocation2 + $0x180] sm:$0xff]
    %v90 = vld [vmem:[#allocation2 + $0x188] sm:$0xff]
    %v91 = vld [vmem:[#allocation2 + $0x190] sm:$0xff]
    %v92 = vld [vmem:[#allocation2 + $0x198] sm:$0xff]
    %v93 = vld [vmem:[#allocation2 + $0x1a0] sm:$0xff]
    %v94 = vld [vmem:[#allocation2 + $0x1a8] sm:$0xff]
    %v95 = vld [vmem:[#allocation2 + $0x1b0] sm:$0xff]
    %v96 = vld [vmem:[#allocation2 + $0x1b8] sm:$0xff]
    %v97 = vld [vmem:[#allocation2 + $0x1c0] sm:$0xff]
    %v98 = vld [vmem:[#allocation2 + $0x1c8] sm:$0xff]
    %v99 = vld [vmem:[#allocation2 + $0x1d0] sm:$0xff]
    %v100 = vld [vmem:[#allocation2 + $0x1d8] sm:$0xff]
    %v101 = vld [vmem:[#allocation2 + $0x1e0] sm:$0xff]
    %v102 = vld [vmem:[#allocation2 + $0x1e8] sm:$0xff]
    %v103 = vld [vmem:[#allocation2 + $0x1f0] sm:$0xff]
    %v104 = vld [vmem:[#allocation2 + $0x1f8] sm:$0xff]
    %v105 = vld [vmem:[#allocation2 + $0x200] sm:$0xff]
    %v106 = vld [vmem:[#allocation2 + $0x208] sm:$0xff]
    %v107 = vld [vmem:[#allocation2 + $0x210] sm:$0xff]
    %v108 = vld [vmem:[#allocation2 + $0x218] sm:$0xff]
    %v109 = vld [vmem:[#allocation2 + $0x220] sm:$0xff]
    %v110 = vld [vmem:[#allocation2 + $0x228] sm:$0xff]
    %v111 = vld [vmem:[#allocation2 + $0x230] sm:$0xff]
    %v112 = vld [vmem:[#allocation2 + $0x238] sm:$0xff]
    %v113 = vld [vmem:[#allocation2 + $0x240] sm:$0xff]
    %v114 = vld [vmem:[#allocation2 + $0x248] sm:$0xff]
    %v115 = vld [vmem:[#allocation2 + $0x250] sm:$0xff]
    %v116 = vld [vmem:[#allocation2 + $0x258] sm:$0xff]
    %v117 = vld [vmem:[#allocation2 + $0x260] sm:$0xff]
    %v118 = vld [vmem:[#allocation2 + $0x268] sm:$0xff]
    %v119 = vld [vmem:[#allocation2 + $0x270] sm:$0xff]
    %v120 = vld [vmem:[#allocation2 + $0x278] sm:$0xff]
    %v121 = vld [vmem:[#allocation2 + $0x280] sm:$0xff]
    %v122 = vld [vmem:[#allocation2 + $0x288] sm:$0xff]
    %v123 = vld [vmem:[#allocation2 + $0x290] sm:$0xff]
    %v124 = vld [vmem:[#allocation2 + $0x298] sm:$0xff]
    %v125 = vld [vmem:[#allocation2 + $0x2a0] sm:$0xff]
    %v126 = vld [vmem:[#allocation2 + $0x2a8] sm:$0xff]
    %v127 = vld [vmem:[#allocation2 + $0x2b0] sm:$0xff]
    %v128 = vld [vmem:[#allocation2 + $0x2b8] sm:$0xff]
    %v129 = vld [vmem:[#allocation2 + $0x2c0] sm:$0xff]
    %v130 = vld [vmem:[#allocation2 + $0x2c8] sm:$0xff]
    %v131 = vld [vmem:[#allocation2 + $0x2d0] sm:$0xff]
    %v132 = vld [vmem:[#allocation2 + $0x2d8] sm:$0xff]
    %v133 = vld [vmem:[#allocation2 + $0x2e0] sm:$0xff]
    %v134 = vld [vmem:[#allocation2 + $0x2e8] sm:$0xff]
    %v135 = vld [vmem:[#allocation2 + $0x2f0] sm:$0xff]
    %v136 = vld [vmem:[#allocation2 + $0x2f8] sm:$0xff]
    %v137 = vpack.c.bf16 %v47, %v41
    %v138 = vpack.c.bf16 %v48, %v42
    %v139 = vpack.c.bf16 %v49, %v43
    %v140 = vpack.c.bf16 %v50, %v44
    %v141 = vpack.c.bf16 %v51, %v45
    %v142 = vpack.c.bf16 %v52, %v46
    %v143 = vpack.c.bf16 %v59, %v53
    %v144 = vpack.c.bf16 %v60, %v54
    %v145 = vpack.c.bf16 %v61, %v55
    %v146 = vpack.c.bf16 %v62, %v56
    %v147 = vpack.c.bf16 %v63, %v57
    %v148 = vpack.c.bf16 %v64, %v58
    %v149 = vpack.c.bf16 %v71, %v65
    %v150 = vpack.c.bf16 %v72, %v66
    %v151 = vpack.c.bf16 %v73, %v67
    %v152 = vpack.c.bf16 %v74, %v68
    %v153 = vpack.c.bf16 %v75, %v69
    %v154 = vpack.c.bf16 %v76, %v70
    %v155 = vpack.c.bf16 %v83, %v77
    %v156 = vpack.c.bf16 %v84, %v78
    %v157 = vpack.c.bf16 %v85, %v79
    %v158 = vpack.c.bf16 %v86, %v80
    %v159 = vpack.c.bf16 %v87, %v81
    %v160 = vpack.c.bf16 %v88, %v82
    %v161 = vpack.c.bf16 %v95, %v89
    %v162 = vpack.c.bf16 %v96, %v90
    %v163 = vpack.c.bf16 %v97, %v91
    %v164 = vpack.c.bf16 %v98, %v92
    %v165 = vpack.c.bf16 %v99, %v93
    %v166 = vpack.c.bf16 %v100, %v94
    %v167 = vpack.c.bf16 %v107, %v101
    %v168 = vpack.c.bf16 %v108, %v102
    %v169 = vpack.c.bf16 %v109, %v103
    %v170 = vpack.c.bf16 %v110, %v104
    %v171 = vpack.c.bf16 %v111, %v105
    %v172 = vpack.c.bf16 %v112, %v106
    %v173 = vpack.c.bf16 %v119, %v113
    %v174 = vpack.c.bf16 %v120, %v114
    %v175 = vpack.c.bf16 %v121, %v115
    %v176 = vpack.c.bf16 %v122, %v116
    %v177 = vpack.c.bf16 %v123, %v117
    %v178 = vpack.c.bf16 %v124, %v118
    %v179 = vpack.c.bf16 %v131, %v125
    %v180 = vpack.c.bf16 %v132, %v126
    %v181 = vpack.c.bf16 %v133, %v127
    %v182 = vpack.c.bf16 %v134, %v128
    %v183 = vpack.c.bf16 %v135, %v129
    %v184 = vpack.c.bf16 %v136, %v130
    %v185 = vld [vmem:[#allocation5] sm:$0xff]
    %v186 = vld [vmem:[#allocation5 + $0x8] sm:$0xff]
    %v187 = vld [vmem:[#allocation5 + $0x10] sm:$0xff]
    %v188 = vld [vmem:[#allocation5 + $0x18] sm:$0xff]
    %v189 = vld [vmem:[#allocation5 + $0x20] sm:$0xff]
    %v190 = vld [vmem:[#allocation5 + $0x28] sm:$0xff]
    %v191 = vld [vmem:[#allocation5 + $0x30] sm:$0xff]
    %v192 = vld [vmem:[#allocation5 + $0x38] sm:$0xff]
    %v193 = vld [vmem:[#allocation5 + $0x40] sm:$0xff]
    %v194 = vld [vmem:[#allocation5 + $0x48] sm:$0xff]
    %v195 = vld [vmem:[#allocation5 + $0x50] sm:$0xff]
    %v196 = vld [vmem:[#allocation5 + $0x58] sm:$0xff]
    %v197 = vld [vmem:[#allocation5 + $0x60] sm:$0xff]
    %v198 = vld [vmem:[#allocation5 + $0x68] sm:$0xff]
    %v199 = vld [vmem:[#allocation5 + $0x70] sm:$0xff]
    %v200 = vld [vmem:[#allocation5 + $0x78] sm:$0xff]
    %v201 = vld [vmem:[#allocation5 + $0x80] sm:$0xff]
    %v202 = vld [vmem:[#allocation5 + $0x88] sm:$0xff]
    %v203 = vld [vmem:[#allocation5 + $0x90] sm:$0xff]
    %v204 = vld [vmem:[#allocation5 + $0x98] sm:$0xff]
    %v205 = vld [vmem:[#allocation5 + $0xa0] sm:$0xff]
    %v206 = vld [vmem:[#allocation5 + $0xa8] sm:$0xff]
    %v207 = vld [vmem:[#allocation5 + $0xb0] sm:$0xff]
    %v208 = vld [vmem:[#allocation5 + $0xb8] sm:$0xff]
    %v209 = vld [vmem:[#allocation5 + $0xc0] sm:$0xff]
    %v210 = vld [vmem:[#allocation5 + $0xc8] sm:$0xff]
    %v211 = vld [vmem:[#allocation5 + $0xd0] sm:$0xff]
    %v212 = vld [vmem:[#allocation5 + $0xd8] sm:$0xff]
    %v213 = vld [vmem:[#allocation5 + $0xe0] sm:$0xff]
    %v214 = vld [vmem:[#allocation5 + $0xe8] sm:$0xff]
    %v215 = vld [vmem:[#allocation5 + $0xf0] sm:$0xff]
    %v216 = vld [vmem:[#allocation5 + $0xf8] sm:$0xff]
    %v217 = vld [vmem:[#allocation5 + $0x100] sm:$0xff]
    %v218 = vld [vmem:[#allocation5 + $0x108] sm:$0xff]
    %v219 = vld [vmem:[#allocation5 + $0x110] sm:$0xff]
    %v220 = vld [vmem:[#allocation5 + $0x118] sm:$0xff]
    %v221 = vld [vmem:[#allocation5 + $0x120] sm:$0xff]
    %v222 = vld [vmem:[#allocation5 + $0x128] sm:$0xff]
    %v223 = vld [vmem:[#allocation5 + $0x130] sm:$0xff]
    %v224 = vld [vmem:[#allocation5 + $0x138] sm:$0xff]
    %v225 = vld [vmem:[#allocation5 + $0x140] sm:$0xff]
    %v226 = vld [vmem:[#allocation5 + $0x148] sm:$0xff]
    %v227 = vld [vmem:[#allocation5 + $0x150] sm:$0xff]
    %v228 = vld [vmem:[#allocation5 + $0x158] sm:$0xff]
    %v229 = vld [vmem:[#allocation5 + $0x160] sm:$0xff]
    %v230 = vld [vmem:[#allocation5 + $0x168] sm:$0xff]
    %v231 = vld [vmem:[#allocation5 + $0x170] sm:$0xff]
    %v232 = vld [vmem:[#allocation5 + $0x178] sm:$0xff]
    %v233 = vld [vmem:[#allocation5 + $0x180] sm:$0xff]
    %v234 = vld [vmem:[#allocation5 + $0x188] sm:$0xff]
    %v235 = vld [vmem:[#allocation5 + $0x190] sm:$0xff]
    %v236 = vld [vmem:[#allocation5 + $0x198] sm:$0xff]
    %v237 = vld [vmem:[#allocation5 + $0x1a0] sm:$0xff]
    %v238 = vld [vmem:[#allocation5 + $0x1a8] sm:$0xff]
    %v239 = vld [vmem:[#allocation5 + $0x1b0] sm:$0xff]
    %v240 = vld [vmem:[#allocation5 + $0x1b8] sm:$0xff]
    %v241 = vld [vmem:[#allocation5 + $0x1c0] sm:$0xff]
    %v242 = vld [vmem:[#allocation5 + $0x1c8] sm:$0xff]
    %v243 = vld [vmem:[#allocation5 + $0x1d0] sm:$0xff]
    %v244 = vld [vmem:[#allocation5 + $0x1d8] sm:$0xff]
    %v245 = vld [vmem:[#allocation5 + $0x1e0] sm:$0xff]
    %v246 = vld [vmem:[#allocation5 + $0x1e8] sm:$0xff]
    %v247 = vld [vmem:[#allocation5 + $0x1f0] sm:$0xff]
    %v248 = vld [vmem:[#allocation5 + $0x1f8] sm:$0xff]
    %v249 = vld [vmem:[#allocation5 + $0x200] sm:$0xff]
    %v250 = vld [vmem:[#allocation5 + $0x208] sm:$0xff]
    %v251 = vld [vmem:[#allocation5 + $0x210] sm:$0xff]
    %v252 = vld [vmem:[#allocation5 + $0x218] sm:$0xff]
    %v253 = vld [vmem:[#allocation5 + $0x220] sm:$0xff]
    %v254 = vld [vmem:[#allocation5 + $0x228] sm:$0xff]
    %v255 = vld [vmem:[#allocation5 + $0x230] sm:$0xff]
    %v256 = vld [vmem:[#allocation5 + $0x238] sm:$0xff]
    %v257 = vld [vmem:[#allocation5 + $0x240] sm:$0xff]
    %v258 = vld [vmem:[#allocation5 + $0x248] sm:$0xff]
    %v259 = vld [vmem:[#allocation5 + $0x250] sm:$0xff]
    %v260 = vld [vmem:[#allocation5 + $0x258] sm:$0xff]
    %v261 = vld [vmem:[#allocation5 + $0x260] sm:$0xff]
    %v262 = vld [vmem:[#allocation5 + $0x268] sm:$0xff]
    %v263 = vld [vmem:[#allocation5 + $0x270] sm:$0xff]
    %v264 = vld [vmem:[#allocation5 + $0x278] sm:$0xff]
    %v265 = vld [vmem:[#allocation5 + $0x280] sm:$0xff]
    %v266 = vld [vmem:[#allocation5 + $0x288] sm:$0xff]
    %v267 = vld [vmem:[#allocation5 + $0x290] sm:$0xff]
    %v268 = vld [vmem:[#allocation5 + $0x298] sm:$0xff]
    %v269 = vld [vmem:[#allocation5 + $0x2a0] sm:$0xff]
    %v270 = vld [vmem:[#allocation5 + $0x2a8] sm:$0xff]
    %v271 = vld [vmem:[#allocation5 + $0x2b0] sm:$0xff]
    %v272 = vld [vmem:[#allocation5 + $0x2b8] sm:$0xff]
    %v273 = vld [vmem:[#allocation5 + $0x2c0] sm:$0xff]
    %v274 = vld [vmem:[#allocation5 + $0x2c8] sm:$0xff]
    %v275 = vld [vmem:[#allocation5 + $0x2d0] sm:$0xff]
    %v276 = vld [vmem:[#allocation5 + $0x2d8] sm:$0xff]
    %v277 = vld [vmem:[#allocation5 + $0x2e0] sm:$0xff]
    %v278 = vld [vmem:[#allocation5 + $0x2e8] sm:$0xff]
    %v279 = vld [vmem:[#allocation5 + $0x2f0] sm:$0xff]
    %v280 = vld [vmem:[#allocation5 + $0x2f8] sm:$0xff]
    %v281 = vpack.c.bf16 %v186, %v185
    %v282 = vpack.c.bf16 %v188, %v187
    %v283 = vpack.c.bf16 %v190, %v189
    %v284 = vpack.c.bf16 %v192, %v191
    %v285 = vpack.c.bf16 %v194, %v193
    %v286 = vpack.c.bf16 %v196, %v195
    %v287 = vpack.c.bf16 %v198, %v197
    %v288 = vpack.c.bf16 %v200, %v199
    %v289 = vpack.c.bf16 %v202, %v201
    %v290 = vpack.c.bf16 %v204, %v203
    %v291 = vpack.c.bf16 %v206, %v205
    %v292 = vpack.c.bf16 %v208, %v207
    %v293 = vpack.c.bf16 %v210, %v209
    %v294 = vpack.c.bf16 %v212, %v211
    %v295 = vpack.c.bf16 %v214, %v213
    %v296 = vpack.c.bf16 %v216, %v215
    %v297 = vpack.c.bf16 %v218, %v217
    %v298 = vpack.c.bf16 %v220, %v219
    %v299 = vpack.c.bf16 %v222, %v221
    %v300 = vpack.c.bf16 %v224, %v223
    %v301 = vpack.c.bf16 %v226, %v225
    %v302 = vpack.c.bf16 %v228, %v227
    %v303 = vpack.c.bf16 %v230, %v229
    %v304 = vpack.c.bf16 %v232, %v231
    %v305 = vpack.c.bf16 %v234, %v233
    %v306 = vpack.c.bf16 %v236, %v235
    %v307 = vpack.c.bf16 %v238, %v237
    %v308 = vpack.c.bf16 %v240, %v239
    %v309 = vpack.c.bf16 %v242, %v241
    %v310 = vpack.c.bf16 %v244, %v243
    %v311 = vpack.c.bf16 %v246, %v245
    %v312 = vpack.c.bf16 %v248, %v247
    %v313 = vpack.c.bf16 %v250, %v249
    %v314 = vpack.c.bf16 %v252, %v251
    %v315 = vpack.c.bf16 %v254, %v253
    %v316 = vpack.c.bf16 %v256, %v255
    %v317 = vpack.c.bf16 %v258, %v257
    %v318 = vpack.c.bf16 %v260, %v259
    %v319 = vpack.c.bf16 %v262, %v261
    %v320 = vpack.c.bf16 %v264, %v263
    %v321 = vpack.c.bf16 %v266, %v265
    %v322 = vpack.c.bf16 %v268, %v267
    %v323 = vpack.c.bf16 %v270, %v269
    %v324 = vpack.c.bf16 %v272, %v271
    %v325 = vpack.c.bf16 %v274, %v273
    %v326 = vpack.c.bf16 %v276, %v275
    %v327 = vpack.c.bf16 %v278, %v277
    %v328 = vpack.c.bf16 %v280, %v279
    %329 = vmatprep.subr.bf16.mxu0 0
    %330 = vmatpush1.bf16.msra.mxu0 %v281
    %331 = vmatprep.subr.bf16.mxu0 0
    %332 = vmatpush1.bf16.msra.mxu0 %v282
    %333 = vmatprep.subr.bf16.mxu0 0
    %334 = vmatpush1.bf16.msra.mxu0 %v283
    %335 = vmatprep.subr.bf16.mxu0 0
    %336 = vmatpush1.bf16.msra.mxu0 %v284
    %337 = vmatprep.subr.bf16.mxu0 0
    %338 = vmatpush1.bf16.msra.mxu0 %v285
    %339 = vmatprep.subr.bf16.mxu0 0
    %340 = vmatpush1.bf16.msra.mxu0 %v286
    %341 = vmatprep.subr.bf16.mxu0 0
    %342 = vmatpush1.bf16.msra.mxu0 %v287
    %343 = vmatprep.subr.bf16.mxu0 0
    %344 = vmatpush1.bf16.msra.mxu0 %v288
    %345 = vmatprep.subr.bf16.mxu0 0
    %346 = vmatpush1.bf16.msra.mxu0 %v289
    %347 = vmatprep.subr.bf16.mxu0 0
    %348 = vmatpush1.bf16.msra.mxu0 %v290
    %349 = vmatprep.subr.bf16.mxu0 0
    %350 = vmatpush1.bf16.msra.mxu0 %v291
    %351 = vmatprep.subr.bf16.mxu0 0
    %352 = vmatpush1.bf16.msra.mxu0 %v292
    %353 = vmatprep.subr.bf16.mxu0 0
    %354 = vmatpush1.bf16.msra.mxu0 %v293
    %355 = vmatprep.subr.bf16.mxu0 0
    %356 = vmatpush1.bf16.msra.mxu0 %v294
    %357 = vmatprep.subr.bf16.mxu0 0
    %358 = vmatpush1.bf16.msra.mxu0 %v295
    %359 = vmatprep.subr.bf16.mxu0 0
    %360 = vmatpush1.bf16.msra.mxu0 %v296
    %361 = vmatprep.mubr.bf16.mxu0 %v138
    %362 = vmatmul.mubr.bf16.gmra.mrb[0].mxu0 %v137
    %v363 = vpop.f32.mrb[0].mxu0
    %v364 = vadd.f32 0.0, %v363
    %v365 = vpop.f32.mrb[0].mxu0
    %v366 = vpop.f32.mrb[0].mxu0
    %v367 = vadd.f32 0.0, %v366
    %v368 = vpop.f32.mrb[0].mxu0
    %369 = vmatprep.mubr.bf16.mxu0 %v144
    %370 = vmatmul.mubr.bf16.gmra.mrb[0].mxu0 %v143
    %v371 = vpop.f32.mrb[0].mxu0
    %v372 = vadd.f32 0.0, %v371
    %v373 = vpop.f32.mrb[0].mxu0
    %v374 = vpop.f32.mrb[0].mxu0
    %v375 = vadd.f32 0.0, %v374
    %v376 = vpop.f32.mrb[0].mxu0
    %377 = vmatprep.mubr.bf16.mxu0 %v150
    %378 = vmatmul.mubr.bf16.gmra.mrb[0].mxu0 %v149
    %v379 = vpop.f32.mrb[0].mxu0
    %v380 = vadd.f32 0.0, %v379
    %v381 = vpop.f32.mrb[0].mxu0
    %v382 = vpop.f32.mrb[0].mxu0
    %v383 = vadd.f32 0.0, %v382
    %v384 = vpop.f32.mrb[0].mxu0
    %385 = vmatprep.mubr.bf16.mxu0 %v156
    %386 = vmatmul.mubr.bf16.gmra.mrb[0].mxu0 %v155
    %v387 = vpop.f32.mrb[0].mxu0
    %v388 = vadd.f32 0.0, %v387
    %v389 = vpop.f32.mrb[0].mxu0
    %v390 = vpop.f32.mrb[0].mxu0
    %v391 = vadd.f32 0.0, %v390
    %v392 = vpop.f32.mrb[0].mxu0
    %393 = vmatprep.mubr.bf16.mxu0 %v162
    %394 = vmatmul.mubr.bf16.gmra.mrb[0].mxu0 %v161
    %v395 = vpop.f32.mrb[0].mxu0
    %v396 = vadd.f32 0.0, %v395
    %v397 = vpop.f32.mrb[0].mxu0
    %v398 = vpop.f32.mrb[0].mxu0
    %v399 = vadd.f32 0.0, %v398
    %v400 = vpop.f32.mrb[0].mxu0
    %401 = vmatprep.mubr.bf16.mxu0 %v168
    %402 = vmatmul.mubr.bf16.gmra.mrb[0].mxu0 %v167
    %v403 = vpop.f32.mrb[0].mxu0
    %v404 = vadd.f32 0.0, %v403
    %v405 = vpop.f32.mrb[0].mxu0
    %v406 = vpop.f32.mrb[0].mxu0
    %v407 = vadd.f32 0.0, %v406
    %v408 = vpop.f32.mrb[0].mxu0
    %409 = vmatprep.mubr.bf16.mxu0 %v174
    %410 = vmatmul.mubr.bf16.gmra.mrb[0].mxu0 %v173
    %v411 = vpop.f32.mrb[0].mxu0
    %v412 = vadd.f32 0.0, %v411
    %v413 = vpop.f32.mrb[0].mxu0
    %v414 = vpop.f32.mrb[0].mxu0
    %v415 = vadd.f32 0.0, %v414
    %v416 = vpop.f32.mrb[0].mxu0
    %417 = vmatprep.mubr.bf16.mxu0 %v180
    %418 = vmatmul.mubr.bf16.gmra.mrb[0].mxu0 %v179
    %v419 = vpop.f32.mrb[0].mxu0
    %v420 = vadd.f32 0.0, %v419
    %v421 = vpop.f32.mrb[0].mxu0
    %v422 = vpop.f32.mrb[0].mxu0
    %v423 = vadd.f32 0.0, %v422
    %v424 = vpop.f32.mrb[0].mxu0
    %425 = vdwg.mxu0
    %426 = vmatprep.subr.bf16.mxu0 0
    %427 = vmatpush1.bf16.msra.mxu0 %v297
    %428 = vmatprep.subr.bf16.mxu0 0
    %429 = vmatpush1.bf16.msra.mxu0 %v298
    %430 = vmatprep.subr.bf16.mxu0 0
    %431 = vmatpush1.bf16.msra.mxu0 %v299
    %432 = vmatprep.subr.bf16.mxu0 0
    %433 = vmatpush1.bf16.msra.mxu0 %v300
    %434 = vmatprep.subr.bf16.mxu0 0
    %435 = vmatpush1.bf16.msra.mxu0 %v301
    %436 = vmatprep.subr.bf16.mxu0 0
    %437 = vmatpush1.bf16.msra.mxu0 %v302
    %438 = vmatprep.subr.bf16.mxu0 0
    %439 = vmatpush1.bf16.msra.mxu0 %v303
    %440 = vmatprep.subr.bf16.mxu0 0
    %441 = vmatpush1.bf16.msra.mxu0 %v304
    %442 = vmatprep.subr.bf16.mxu0 0
    %443 = vmatpush1.bf16.msra.mxu0 %v305
    %444 = vmatprep.subr.bf16.mxu0 0
    %445 = vmatpush1.bf16.msra.mxu0 %v306
    %446 = vmatprep.subr.bf16.mxu0 0
    %447 = vmatpush1.bf16.msra.mxu0 %v307
    %448 = vmatprep.subr.bf16.mxu0 0
    %449 = vmatpush1.bf16.msra.mxu0 %v308
    %450 = vmatprep.subr.bf16.mxu0 0
    %451 = vmatpush1.bf16.msra.mxu0 %v309
    %452 = vmatprep.subr.bf16.mxu0 0
    %453 = vmatpush1.bf16.msra.mxu0 %v310
    %454 = vmatprep.subr.bf16.mxu0 0
    %455 = vmatpush1.bf16.msra.mxu0 %v311
    %456 = vmatprep.subr.bf16.mxu0 0
    %457 = vmatpush1.bf16.msra.mxu0 %v312
    %458 = vmatprep.mubr.bf16.mxu0 %v140
    %459 = vmatmul.mubr.bf16.gmra.mrb[0].mxu0 %v139
    %v460 = vpop.f32.mrb[0].mxu0
    %v461 = vadd.f32 %v364, %v460
    %v462 = vpop.f32.mrb[0].mxu0
    %v463 = vpop.f32.mrb[0].mxu0
    %v464 = vadd.f32 %v367, %v463
    %v465 = vpop.f32.mrb[0].mxu0
    %466 = vmatprep.mubr.bf16.mxu0 %v146
    %467 = vmatmul.mubr.bf16.gmra.mrb[0].mxu0 %v145
    %v468 = vpop.f32.mrb[0].mxu0
    %v469 = vadd.f32 %v372, %v468
    %v470 = vpop.f32.mrb[0].mxu0
    %v471 = vpop.f32.mrb[0].mxu0
    %v472 = vadd.f32 %v375, %v471
    %v473 = vpop.f32.mrb[0].mxu0
    %474 = vmatprep.mubr.bf16.mxu0 %v152
    %475 = vmatmul.mubr.bf16.gmra.mrb[0].mxu0 %v151
    %v476 = vpop.f32.mrb[0].mxu0
    %v477 = vadd.f32 %v380, %v476
    %v478 = vpop.f32.mrb[0].mxu0
    %v479 = vpop.f32.mrb[0].mxu0
    %v480 = vadd.f32 %v383, %v479
    %v481 = vpop.f32.mrb[0].mxu0
    %482 = vmatprep.mubr.bf16.mxu0 %v158
    %483 = vmatmul.mubr.bf16.gmra.mrb[0].mxu0 %v157
    %v484 = vpop.f32.mrb[0].mxu0
    %v485 = vadd.f32 %v388, %v484
    %v486 = vpop.f32.mrb[0].mxu0
    %v487 = vpop.f32.mrb[0].mxu0
    %v488 = vadd.f32 %v391, %v487
    %v489 = vpop.f32.mrb[0].mxu0
    %490 = vmatprep.mubr.bf16.mxu0 %v164
    %491 = vmatmul.mubr.bf16.gmra.mrb[0].mxu0 %v163
    %v492 = vpop.f32.mrb[0].mxu0
    %v493 = vadd.f32 %v396, %v492
    %v494 = vpop.f32.mrb[0].mxu0
    %v495 = vpop.f32.mrb[0].mxu0
    %v496 = vadd.f32 %v399, %v495
    %v497 = vpop.f32.mrb[0].mxu0
    %498 = vmatprep.mubr.bf16.mxu0 %v170
    %499 = vmatmul.mubr.bf16.gmra.mrb[0].mxu0 %v169
    %v500 = vpop.f32.mrb[0].mxu0
    %v501 = vadd.f32 %v404, %v500
    %v502 = vpop.f32.mrb[0].mxu0
    %v503 = vpop.f32.mrb[0].mxu0
    %v504 = vadd.f32 %v407, %v503
    %v505 = vpop.f32.mrb[0].mxu0
    %506 = vmatprep.mubr.bf16.mxu0 %v176
    %507 = vmatmul.mubr.bf16.gmra.mrb[0].mxu0 %v175
    %v508 = vpop.f32.mrb[0].mxu0
    %v509 = vadd.f32 %v412, %v508
    %v510 = vpop.f32.mrb[0].mxu0
    %v511 = vpop.f32.mrb[0].mxu0
    %v512 = vadd.f32 %v415, %v511
    %v513 = vpop.f32.mrb[0].mxu0
    %514 = vmatprep.mubr.bf16.mxu0 %v182
    %515 = vmatmul.mubr.bf16.gmra.mrb[0].mxu0 %v181
    %v516 = vpop.f32.mrb[0].mxu0
    %v517 = vadd.f32 %v420, %v516
    %v518 = vpop.f32.mrb[0].mxu0
    %v519 = vpop.f32.mrb[0].mxu0
    %v520 = vadd.f32 %v423, %v519
    %v521 = vpop.f32.mrb[0].mxu0
    %522 = vdwg.mxu0
    %523 = vmatprep.subr.bf16.mxu0 0
    %524 = vmatpush1.bf16.msra.mxu0 %v313
    %525 = vmatprep.subr.bf16.mxu0 0
    %526 = vmatpush1.bf16.msra.mxu0 %v314
    %527 = vmatprep.subr.bf16.mxu0 0
    %528 = vmatpush1.bf16.msra.mxu0 %v315
    %529 = vmatprep.subr.bf16.mxu0 0
    %530 = vmatpush1.bf16.msra.mxu0 %v316
    %531 = vmatprep.subr.bf16.mxu0 0
    %532 = vmatpush1.bf16.msra.mxu0 %v317
    %533 = vmatprep.subr.bf16.mxu0 0
    %534 = vmatpush1.bf16.msra.mxu0 %v318
    %535 = vmatprep.subr.bf16.mxu0 0
    %536 = vmatpush1.bf16.msra.mxu0 %v319
    %537 = vmatprep.subr.bf16.mxu0 0
    %538 = vmatpush1.bf16.msra.mxu0 %v320
    %539 = vmatprep.subr.bf16.mxu0 0
    %540 = vmatpush1.bf16.msra.mxu0 %v321
    %541 = vmatprep.subr.bf16.mxu0 0
    %542 = vmatpush1.bf16.msra.mxu0 %v322
    %543 = vmatprep.subr.bf16.mxu0 0
    %544 = vmatpush1.bf16.msra.mxu0 %v323
    %545 = vmatprep.subr.bf16.mxu0 0
    %546 = vmatpush1.bf16.msra.mxu0 %v324
    %547 = vmatprep.subr.bf16.mxu0 0
    %548 = vmatpush1.bf16.msra.mxu0 %v325
    %549 = vmatprep.subr.bf16.mxu0 0
    %550 = vmatpush1.bf16.msra.mxu0 %v326
    %551 = vmatprep.subr.bf16.mxu0 0
    %552 = vmatpush1.bf16.msra.mxu0 %v327
    %553 = vmatprep.subr.bf16.mxu0 0
    %554 = vmatpush1.bf16.msra.mxu0 %v328
    %555 = vmatprep.mubr.bf16.mxu0 %v142
    %556 = vmatmul.mubr.bf16.gmra.mrb[0].mxu0 %v141
    %v557 = vpop.f32.mrb[0].mxu0
    %v558 = vadd.f32 %v461, %v557
    %v559 = vpop.f32.mrb[0].mxu0
    %v560 = vpop.f32.mrb[0].mxu0
    %v561 = vadd.f32 %v464, %v560
    %v562 = vpop.f32.mrb[0].mxu0
    %563 = vmatprep.mubr.bf16.mxu0 %v148
    %564 = vmatmul.mubr.bf16.gmra.mrb[0].mxu0 %v147
    %v565 = vpop.f32.mrb[0].mxu0
    %v566 = vadd.f32 %v469, %v565
    %v567 = vpop.f32.mrb[0].mxu0
    %v568 = vpop.f32.mrb[0].mxu0
    %v569 = vadd.f32 %v472, %v568
    %v570 = vpop.f32.mrb[0].mxu0
    %571 = vmatprep.mubr.bf16.mxu0 %v154
    %572 = vmatmul.mubr.bf16.gmra.mrb[0].mxu0 %v153
    %v573 = vpop.f32.mrb[0].mxu0
    %v574 = vadd.f32 %v477, %v573
    %v575 = vpop.f32.mrb[0].mxu0
    %v576 = vpop.f32.mrb[0].mxu0
    %v577 = vadd.f32 %v480, %v576
    %v578 = vpop.f32.mrb[0].mxu0
    %579 = vmatprep.mubr.bf16.mxu0 %v160
    %580 = vmatmul.mubr.bf16.gmra.mrb[0].mxu0 %v159
    %v581 = vpop.f32.mrb[0].mxu0
    %v582 = vadd.f32 %v485, %v581
    %v583 = vpop.f32.mrb[0].mxu0
    %v584 = vpop.f32.mrb[0].mxu0
    %v585 = vadd.f32 %v488, %v584
    %v586 = vpop.f32.mrb[0].mxu0
    %587 = vmatprep.mubr.bf16.mxu0 %v166
    %588 = vmatmul.mubr.bf16.gmra.mrb[0].mxu0 %v165
    %v589 = vpop.f32.mrb[0].mxu0
    %v590 = vadd.f32 %v493, %v589
    %v591 = vpop.f32.mrb[0].mxu0
    %v592 = vpop.f32.mrb[0].mxu0
    %v593 = vadd.f32 %v496, %v592
    %v594 = vpop.f32.mrb[0].mxu0
    %595 = vmatprep.mubr.bf16.mxu0 %v172
    %596 = vmatmul.mubr.bf16.gmra.mrb[0].mxu0 %v171
    %v597 = vpop.f32.mrb[0].mxu0
    %v598 = vadd.f32 %v501, %v597
    %v599 = vpop.f32.mrb[0].mxu0
    %v600 = vpop.f32.mrb[0].mxu0
    %v601 = vadd.f32 %v504, %v600
    %v602 = vpop.f32.mrb[0].mxu0
    %603 = vmatprep.mubr.bf16.mxu0 %v178
    %604 = vmatmul.mubr.bf16.gmra.mrb[0].mxu0 %v177
    %v605 = vpop.f32.mrb[0].mxu0
    %v606 = vadd.f32 %v509, %v605
    %v607 = vpop.f32.mrb[0].mxu0
    %v608 = vpop.f32.mrb[0].mxu0
    %v609 = vadd.f32 %v512, %v608
    %v610 = vpop.f32.mrb[0].mxu0
    %611 = vmatprep.mubr.bf16.mxu0 %v184
    %612 = vmatmul.mubr.bf16.gmra.mrb[0].mxu0 %v183
    %v613 = vpop.f32.mrb[0].mxu0
    %v614 = vadd.f32 %v517, %v613
    %v615 = vpop.f32.mrb[0].mxu0
    %v616 = vpop.f32.mrb[0].mxu0
    %v617 = vadd.f32 %v520, %v616
    %v618 = vpop.f32.mrb[0].mxu0
    %619 = vdwg.mxu0
    %620 = vst [vmem:[#allocation7] sm:$0xff] %v558
    %621 = vst [vmem:[#allocation7 + $0x8] sm:$0xff] %v561
    %622 = vst [vmem:[#allocation7 + $0x10] sm:$0xff] %v566
    %623 = vst [vmem:[#allocation7 + $0x18] sm:$0xff] %v569
    %624 = vst [vmem:[#allocation7 + $0x20] sm:$0xff] %v574
    %625 = vst [vmem:[#allocation7 + $0x28] sm:$0xff] %v577
    %626 = vst [vmem:[#allocation7 + $0x30] sm:$0xff] %v582
    %627 = vst [vmem:[#allocation7 + $0x38] sm:$0xff] %v585
    %628 = vst [vmem:[#allocation7 + $0x40] sm:$0xff] %v590
    %629 = vst [vmem:[#allocation7 + $0x48] sm:$0xff] %v593
    %630 = vst [vmem:[#allocation7 + $0x50] sm:$0xff] %v598
    %631 = vst [vmem:[#allocation7 + $0x58] sm:$0xff] %v601
    %632 = vst [vmem:[#allocation7 + $0x60] sm:$0xff] %v606
    %633 = vst [vmem:[#allocation7 + $0x68] sm:$0xff] %v609
    %634 = vst [vmem:[#allocation7 + $0x70] sm:$0xff] %v614
    %635 = vst [vmem:[#allocation7 + $0x78] sm:$0xff] %v617
    // Predicated region
    $region18: #{tpu_custom_call.1} parent=1 // pred_check
      _
    $region19: #{tpu_custom_call.1} parent=1 // pred_check_branch
      %637 = sbr.rel (0) target = $region21
    $region20: #{tpu_custom_call.1} parent=1 // pred_region
      %s639 = ssub.s32 2048, 2048
      %640 = vsyncadd [#allocation4], %s639
      %s641 = sshll.u32 [#allocation7], 4
      %s642 = int_to_ptr.vmem [resolvable:$true] %s641
      %647 = dma.vmem_to_hbm [thread:$0]  %s642, 2048, %s2, [#allocation4], 128, 128, 8
    $region21: #{tpu_custom_call.1} parent=1 // pred_fallthru
      _
    // Predicated region
    $region22: #{tpu_custom_call.1} parent=1 // pred_check
      _
    $region23: #{tpu_custom_call.1} parent=1 // pred_check_branch
      %649 = sbr.rel (0) target = $region25
    $region24: #{tpu_custom_call.1} parent=1 // pred_region
      %650 = dma.done [#allocation4], 2048
    $region25: #{tpu_custom_call.1} parent=1 // pred_fallthru
      _
    %651 = vsyncpa [#allocation3], 1
    %652 = vsyncpa [#allocation6], 1
    %653 = vsyncpa [#allocation4], 1

</llo_original>
